<compile_context>
chip_gen: v5e
topology: v5e:2x2
jax: 0.10.0
libtpu: 0.0.40
codegen_flags: <defaults>
</compile_context>

<pallas_src>
import functools

import jax
import jax.numpy as jnp
from jax.experimental import pallas as pl
from jax.experimental.pallas import tpu as pltpu

_MASK_VAL = -1e30   # additive logit for non-edges
_M_INIT = -1e20     # running-max init floor: keeps exp(_MASK_VAL - m) == 0
_BN_EPS = 1e-5


def _round_up(v, m):
    return (v + m - 1) // m * m


def _pick_tile(n, candidates, min_tiles=1):
    """Largest candidate tile that divides n (preferring >= min_tiles tiles,
    which keeps the 'parallel' dst axis shardable across v7x's two cores)."""
    for c in candidates:
        if n % c == 0 and n // c >= min_tiles:
            return c
    for c in candidates:
        if n % c == 0:
            return c
    return n


# ----------------------------------------------------------------------------
# Kernel 1: fused (BatchNorm) + concatenated projection + attention logits
# ----------------------------------------------------------------------------
def _project_kernel(*refs, d_tot_pad, has_bn, residual):
    it = iter(refs)
    x_ref, w_ref = next(it), next(it)
    scale_ref = shift_ref = None
    if has_bn:
        scale_ref, shift_ref = next(it), next(it)
    feat_ref = next(it)
    res_ref = next(it) if residual else None
    elr_ref = next(it)

    x = x_ref[...]                                     # (TM, Fin_pad) f32
    if has_bn:
        x = x * scale_ref[...] + shift_ref[...]        # eval-mode BatchNorm1d
    xb = x.astype(jnp.bfloat16)

    # One lane-concatenated matmul: [feat | (res) | el/er] output columns.
    y = jnp.dot(xb, w_ref[...], preferred_element_type=jnp.float32)
    feat_ref[...] = y[:, :d_tot_pad].astype(feat_ref.dtype)      # bf16
    off = d_tot_pad
    if residual:
        res_ref[...] = y[:, off:off + d_tot_pad].astype(res_ref.dtype)
        off += d_tot_pad
    elr_ref[...] = y[:, off:off + 128]                 # el in [0,H), er in [H,2H)


# ----------------------------------------------------------------------------
# Kernel 2: masked edge-softmax + aggregation (online softmax over src tiles)
# ----------------------------------------------------------------------------
def _attention_kernel(*refs, num_heads, out_dim, d_tot_pad, neg_slope,
                      residual, apply_act, binary_adj):
    it = iter(refs)
    adj_ref, elt_ref, elr_ref, feat_ref = next(it), next(it), next(it), next(it)
    res_ref = next(it) if residual else None
    o_ref = next(it)
    m_sc, l_sc, acc_sc = next(it), next(it), next(it)

    k_idx = pl.program_id(1)

    @pl.when(k_idx == 0)
    def _init():
        m_sc[...] = jnp.full_like(m_sc, _M_INIT)
        l_sc[...] = jnp.zeros_like(l_sc)
        acc_sc[...] = jnp.zeros_like(acc_sc)

    adj_f = adj_ref[...].astype(jnp.float32)           # (TM, TK) edge counts
    has_edge = adj_f > 0.0                             # shared across heads

    lane = jax.lax.broadcasted_iota(jnp.int32, (1, d_tot_pad), 1)

    feat_t = feat_ref[...]                             # (TK, DT) bf16 head-packed
    pv_total = jnp.zeros(acc_sc.shape, jnp.float32)
    corr_lanes = jnp.zeros(acc_sc.shape, jnp.float32)

    for h in range(num_heads):                         # static unroll, H small
        head_mask = (lane >= h * out_dim) & (lane < (h + 1) * out_dim)
        mask_f = head_mask.astype(jnp.float32)         # (1, DT)

        el_row = elt_ref[h:h + 1, :]                   # (1, TK) src logits
        er_col = elr_ref[:, num_heads + h:num_heads + h + 1]   # (TM, 1) dst
        s = er_col + el_row                            # (TM, TK)
        s = jnp.maximum(s, neg_slope * s)              # LeakyReLU (slope < 1)
        s = jnp.where(has_edge, s, _MASK_VAL)          # mask non-edges

        m_prev = m_sc[h]
        m_new = jnp.maximum(m_prev, jnp.max(s, axis=-1, keepdims=True))
        p = jnp.exp(s - m_new)                         # masked entries -> 0
        if not binary_adj:
            p = adj_f * p                              # multigraph edge counts
        corr = jnp.exp(m_prev - m_new)
        l_sc[h] = corr * l_sc[h] + jnp.sum(p, axis=-1, keepdims=True)
        m_sc[h] = m_new

        # Lane-masked V so P_h only contributes to head h's lanes of the
        # single head-packed accumulator.
        feat_h = feat_t * mask_f.astype(feat_t.dtype) if num_heads > 1 else feat_t
        pv_total = pv_total + jnp.dot(p.astype(jnp.bfloat16), feat_h,
                                      preferred_element_type=jnp.float32)
        corr_lanes = corr_lanes + corr * mask_f

    acc_sc[...] = corr_lanes * acc_sc[...] + pv_total

    @pl.when(k_idx == pl.num_programs(1) - 1)
    def _finalize():
        inv_lanes = jnp.zeros(acc_sc.shape, jnp.float32)
        for h in range(num_heads):
            head_mask = (lane >= h * out_dim) & (lane < (h + 1) * out_dim)
            denom = l_sc[h]
            inv = jnp.where(denom > 0.0, pl.reciprocal(denom, approx=True), 0.0)
            inv_lanes = inv_lanes + inv * head_mask.astype(jnp.float32)
        out = acc_sc[...] * inv_lanes
        if residual:
            out = out + res_ref[...].astype(jnp.float32)
        if apply_act:                                  # ELU
            out = jnp.where(out > 0.0, out, jnp.exp(out) - 1.0)
        o_ref[...] = out.astype(o_ref.dtype)


# ----------------------------------------------------------------------------
# Parameter packing (padding / head-packed layout — wrapper-side plumbing)
# ----------------------------------------------------------------------------
def _pack_proj_weights(lp, num_heads, out_dim, fin, fin_pad, d_tot, d_tot_pad,
                       residual):
    """Lane-concatenated bf16 weights: [ W^T | (W_res^T) | el cols | er cols ]."""
    w = lp['w'].astype(jnp.float32)                          # (H*D, fin)
    blocks = [jnp.pad(jnp.transpose(w),
                      ((0, fin_pad - fin), (0, d_tot_pad - d_tot)))]
    if residual:
        if lp.get('w_res') is not None:
            wrt = jnp.transpose(lp['w_res'].astype(jnp.float32))   # (fin, H*D)
        else:
            assert fin == d_tot, "identity residual needs fin == heads*out_dim"
            wrt = jnp.eye(fin, dtype=jnp.float32)
        blocks.append(jnp.pad(wrt, ((0, fin_pad - fin), (0, d_tot_pad - d_tot))))
    # Pre-folded attention-logit weights: col h = W_h^T a_l_h, col H+h = W_h^T a_r_h.
    w3 = w.reshape(num_heads, out_dim, fin)
    w_el = jnp.einsum('hdf,hd->fh', w3, lp['attn_l'].astype(jnp.float32))
    w_er = jnp.einsum('hdf,hd->fh', w3, lp['attn_r'].astype(jnp.float32))
    w_elr = jnp.concatenate([w_el, w_er], axis=1)            # (fin, 2H)
    blocks.append(jnp.pad(w_elr,
                          ((0, fin_pad - fin), (0, 128 - 2 * num_heads))))
    w_all = jnp.concatenate(blocks, axis=1).astype(jnp.bfloat16)
    return w_all, w_all.shape[1]


# ----------------------------------------------------------------------------
# One GATConv layer
# ----------------------------------------------------------------------------
def gat_conv(adj_i8, x, lp, *, num_heads, out_dim, neg_slope, residual,
             apply_act, bn=None, binary_adj=True,
             tile_m=None, tile_k=None, proj_tile_m=None):
    n, fin = x.shape
    assert n % 128 == 0, "pad the node count to a multiple of 128"
    fin_pad = _round_up(fin, 128)
    d_tot = num_heads * out_dim
    d_tot_pad = _round_up(d_tot, 128)

    # Attention tiles: tile_k=256 gives K=256 P@V matmuls (fills v6e/v7x MXU);
    # tile_m kept so the 'parallel' dst axis has >=2 tiles (v7x megacore) and
    # TM*TK <= 128*256 to avoid spilling the f32 logit tile out of the vregs.
    # Working set per step is < 2 MiB: well within scoped VMEM on v5e/v6e/v7x.
    if tile_m is None:
        tile_m = _pick_tile(n, (256, 128), min_tiles=2)
    if tile_k is None:
        tile_k = _pick_tile(n, (256, 128))
    if proj_tile_m is None:
        proj_tile_m = _pick_tile(n, (256, 128), min_tiles=2)

    x_p = jnp.pad(x, ((0, 0), (0, fin_pad - fin)))
    w_all, n_cols = _pack_proj_weights(lp, num_heads, out_dim, fin, fin_pad,
                                       d_tot, d_tot_pad, residual)

    has_bn = bn is not None
    inputs = [x_p, w_all]
    in_specs = [
        pl.BlockSpec((proj_tile_m, fin_pad), lambda i: (i, 0)),
        pl.BlockSpec((fin_pad, n_cols), lambda i: (0, 0)),
    ]
    if has_bn:
        inputs += [bn[0], bn[1]]
        in_specs += [pl.BlockSpec((1, fin_pad), lambda i: (0, 0)),
                     pl.BlockSpec((1, fin_pad), lambda i: (0, 0))]

    out_shape = [jax.ShapeDtypeStruct((n, d_tot_pad), jnp.bfloat16)]   # feat
    out_specs = [pl.BlockSpec((proj_tile_m, d_tot_pad), lambda i: (i, 0))]
    if residual:
        out_shape.append(jax.ShapeDtypeStruct((n, d_tot_pad), jnp.bfloat16))
        out_specs.append(pl.BlockSpec((proj_tile_m, d_tot_pad), lambda i: (i, 0)))
    out_shape.append(jax.ShapeDtypeStruct((n, 128), jnp.float32))       # el|er
    out_specs.append(pl.BlockSpec((proj_tile_m, 128), lambda i: (i, 0)))

    proj = pl.pallas_call(
        functools.partial(_project_kernel, d_tot_pad=d_tot_pad,
                          has_bn=has_bn, residual=residual),
        grid=(n // proj_tile_m,),
        in_specs=in_specs, out_specs=out_specs, out_shape=out_shape,
        compiler_params=pltpu.CompilerParams(
            dimension_semantics=("parallel",)),
    )(*inputs)

    if residual:
        feat, res, elr = proj
    else:
        feat, elr = proj
        res = None

    # src-side logits transposed in glue JAX so the attention kernel reads them
    # as lane-aligned rows (layout plumbing only, tiny (N,H) array).
    el_t = jnp.transpose(elr[:, :num_heads])            # (H, N)

    att_inputs = [adj_i8, el_t, elr, feat]
    att_in_specs = [
        pl.BlockSpec((tile_m, tile_k), lambda i, k: (i, k)),
        pl.BlockSpec((num_heads, tile_k), lambda i, k: (0, k)),
        pl.BlockSpec((tile_m, 128), lambda i, k: (i, 0)),
        pl.BlockSpec((tile_k, d_tot_pad), lambda i, k: (k, 0)),
    ]
    if residual:
        att_inputs.append(res)
        att_in_specs.append(
            pl.BlockSpec((tile_m, d_tot_pad), lambda i, k: (i, 0)))

    out = pl.pallas_call(
        functools.partial(_attention_kernel, num_heads=num_heads,
                          out_dim=out_dim, d_tot_pad=d_tot_pad,
                          neg_slope=neg_slope, residual=residual,
                          apply_act=apply_act, binary_adj=binary_adj),
        grid=(n // tile_m, n // tile_k),
        in_specs=att_in_specs,
        out_specs=pl.BlockSpec((tile_m, d_tot_pad), lambda i, k: (i, 0)),
        out_shape=jax.ShapeDtypeStruct((n, d_tot_pad), jnp.float32),
        scratch_shapes=[
            pltpu.VMEM((num_heads, tile_m, 1), jnp.float32),     # running max
            pltpu.VMEM((num_heads, tile_m, 1), jnp.float32),     # running denom
            pltpu.VMEM((tile_m, d_tot_pad), jnp.float32),        # head-packed acc
        ],
        compiler_params=pltpu.CompilerParams(
            dimension_semantics=("parallel", "arbitrary")),
    )(*att_inputs)

    # Head-packed output: lanes [h*D,(h+1)*D) == head h  ->  == .flatten(1).
    return out[:, :d_tot]                                # (N, H*D)


# ----------------------------------------------------------------------------
# Full GAT forward (kernel path)
# ----------------------------------------------------------------------------
def gat_forward(adj, x, params, cfg, *, binary_adj=True):
    n, in_dim = x.shape
    # int8 adjacency: 4x less N^2 HBM than f32 (exact for edge counts < 128;
    # set binary_adj=False for multigraph edge-count weighting).
    adj_i8 = adj.astype(jnp.int8)

    bn = params['bn']
    scale = bn['gamma'] / jnp.sqrt(bn['var'] + _BN_EPS)
    shift = bn['beta'] - bn['mean'] * scale
    fin_pad0 = _round_up(in_dim, 128)
    bn_scale = jnp.pad(scale, (0, fin_pad0 - in_dim)).reshape(1, fin_pad0)
    bn_shift = jnp.pad(shift, (0, fin_pad0 - in_dim)).reshape(1, fin_pad0)

    h = x
    for l in range(cfg['num_layers']):
        h = gat_conv(adj_i8, h, params['layers'][l],
                     num_heads=cfg['heads'][l], out_dim=cfg['num_hidden'],
                     neg_slope=cfg['negative_slope'],
                     residual=(l > 0) and cfg['residual'], apply_act=True,
                     bn=(bn_scale, bn_shift) if l == 0 else None,
                     binary_adj=binary_adj)
    out = gat_conv(adj_i8, h, params['layers'][-1],
                   num_heads=cfg['heads'][-1], out_dim=cfg['num_classes'],
                   neg_slope=cfg['negative_slope'],
                   residual=cfg['residual'], apply_act=False, bn=None,
                   binary_adj=binary_adj)
    hf = cfg['heads'][-1]
    return jnp.mean(out.reshape(n, hf, cfg['num_classes']), axis=1)


# ----------------------------------------------------------------------------
# Pure-jnp reference (f32) of the same math
# ----------------------------------------------------------------------------
def _gat_layer_ref(adj, x, lp, *, num_heads, out_dim, neg_slope, residual,
                   apply_act):
    n = x.shape[0]
    feat = (x @ lp['w'].T).reshape(n, num_heads, out_dim)
    el = jnp.sum(feat * lp['attn_l'][None], axis=-1)   # (N, H)
    er = jnp.sum(feat * lp['attn_r'][None], axis=-1)   # (N, H)
    e = el[None, :, :] + er[:, None, :]                # (dst, src, H)
    e = jnp.where(e > 0.0, e, neg_slope * e)
    mask = (adj > 0.0)[:, :, None]
    e = jnp.where(mask, e, _MASK_VAL)
    e = e - jnp.max(e, axis=1, keepdims=True)
    w = adj[:, :, None] * jnp.exp(e)
    alpha = w / jnp.maximum(jnp.sum(w, axis=1, keepdims=True), 1e-30)
    rst = jnp.einsum('dsh,shf->dhf', alpha, feat)
    if residual:
        if lp.get('w_res') is not None:
            rst = rst + (x @ lp['w_res'].T).reshape(n, -1, out_dim)
        else:
            rst = rst + x.reshape(n, num_heads, out_dim)
    if apply_act:
        rst = jnp.where(rst > 0.0, rst, jnp.exp(rst) - 1.0)
    return rst


def reference_forward(adj, x, params, cfg):
    bn = params['bn']
    h = (x - bn['mean']) / jnp.sqrt(bn['var'] + _BN_EPS) * bn['gamma'] + bn['beta']
    n = x.shape[0]
    for l in range(cfg['num_layers']):
        out = _gat_layer_ref(adj, h, params['layers'][l],
                             num_heads=cfg['heads'][l],
                             out_dim=cfg['num_hidden'],
                             neg_slope=cfg['negative_slope'],
                             residual=(l > 0) and cfg['residual'],
                             apply_act=True)
        h = out.reshape(n, -1)
    out = _gat_layer_ref(adj, h, params['layers'][-1],
                         num_heads=cfg['heads'][-1],
                         out_dim=cfg['num_classes'],
                         neg_slope=cfg['negative_slope'],
                         residual=cfg['residual'], apply_act=False)
    return jnp.mean(out, axis=1)


# ----------------------------------------------------------------------------
# Deterministic parameter init (PyTorch-conventions: Linear weight (out, in))
# ----------------------------------------------------------------------------
def init_params(key, cfg):
    num_layers = cfg['num_layers']
    heads = cfg['heads']
    in_dims = ([cfg['in_dim']]
               + [cfg['num_hidden'] * heads[l - 1] for l in range(1, num_layers)]
               + [cfg['num_hidden'] * heads[num_layers - 1]])
    out_dims = [cfg['num_hidden']] * num_layers + [cfg['num_classes']]

    keys = iter(jax.random.split(key, 4 * (num_layers + 1) + 4))
    layers = []
    for li in range(num_layers + 1):
        fin, dout, h = in_dims[li], out_dims[li], heads[li]
        lp = {
            'w': 0.3 * jax.random.normal(next(keys), (h * dout, fin), jnp.float32),
            'attn_l': 0.3 * jax.random.normal(next(keys), (h, dout), jnp.float32),
            'attn_r': 0.3 * jax.random.normal(next(keys), (h, dout), jnp.float32),
            'w_res': None,
        }
        if cfg['residual'] and li > 0 and fin != h * dout:
            lp['w_res'] = 0.3 * jax.random.normal(next(keys), (h * dout, fin),
                                                  jnp.float32)
        else:
            _ = next(keys)   # keep key consumption deterministic
        layers.append(lp)
    bn = {
        'gamma': 1.0 + 0.1 * jax.random.normal(next(keys), (cfg['in_dim'],), jnp.float32),
        'beta': 0.1 * jax.random.normal(next(keys), (cfg['in_dim'],), jnp.float32),
        'mean': 0.1 * jax.random.normal(next(keys), (cfg['in_dim'],), jnp.float32),
        'var': jnp.abs(1.0 + 0.1 * jax.random.normal(next(keys), (cfg['in_dim'],), jnp.float32)),
    }
    return {'layers': layers, 'bn': bn}


if __name__ == "__main__":
    cfg = dict(num_layers=2, in_dim=16, num_hidden=8, num_classes=4,
               heads=[2, 2, 1], negative_slope=0.2, residual=True)
    N = 256

    key = jax.random.PRNGKey(0)
    k_feat, k_adj, k_param = jax.random.split(key, 3)

    features = jax.random.normal(k_feat, (N, cfg['in_dim']), jnp.float32)
    adj = jax.random.bernoulli(k_adj, p=0.05, shape=(N, N)).astype(jnp.float32)
    adj = jnp.maximum(adj, jnp.eye(N, dtype=jnp.float32))      # self loops

    params = init_params(k_param, cfg)

    logits = gat_forward(adj, features, params, cfg, binary_adj=True)
    logits = jax.block_until_ready(logits)

    with jax.default_matmul_precision("float32"):
        ref = reference_forward(adj, features, params, cfg)
    ref = jax.block_until_ready(ref)

    assert logits.shape == (N, cfg['num_classes'])
    max_err = jnp.max(jnp.abs(logits - ref))
    assert jnp.allclose(logits, ref, atol=5e-2, rtol=5e-2), \
        f"max abs err {max_err}"

    print("KERNEL_OK")
</pallas_src>

<mosaic_0001>
module attributes {stable_mosaic.version = 11 : i64} {
  func.func @_project_kernel(%arg0: i32, %arg1: memref<128x128xf32, #tpu.memory_space<vmem>>, %arg2: memref<128x256xbf16, #tpu.memory_space<vmem>>, %arg3: memref<1x128xf32, #tpu.memory_space<vmem>>, %arg4: memref<1x128xf32, #tpu.memory_space<vmem>>, %arg5: memref<128x128xbf16, #tpu.memory_space<vmem>>, %arg6: memref<128x128xf32, #tpu.memory_space<vmem>>) attributes {dimension_semantics = [#tpu.dimension_semantics<parallel>], iteration_bounds = array<i64: 2>, scalar_prefetch = 0 : i64, scratch_operands = 0 : i64, tpu.core_type = #tpu.core_type<tc>, window_params = [{transform_indices = @transform_0, window_bounds = array<i64: 128, 128>}, {pipeline_mode = #tpu.pipeline_mode<synchronous>, transform_indices = @transform_1, window_bounds = array<i64: 128, 256>}, {pipeline_mode = #tpu.pipeline_mode<synchronous>, transform_indices = @transform_2, window_bounds = array<i64: 1, 128>}, {pipeline_mode = #tpu.pipeline_mode<synchronous>, transform_indices = @transform_3, window_bounds = array<i64: 1, 128>}, {transform_indices = @transform_4, window_bounds = array<i64: 128, 128>}, {transform_indices = @transform_5, window_bounds = array<i64: 128, 128>}]} {
    %c0 = arith.constant 0 : index
    %c0_0 = arith.constant 0 : index
    %0 = vector.load %arg1[%c0, %c0_0] : memref<128x128xf32, #tpu.memory_space<vmem>>, vector<128x128xf32>
    %c0_1 = arith.constant 0 : index
    %c0_2 = arith.constant 0 : index
    %1 = vector.load %arg3[%c0_1, %c0_2] : memref<1x128xf32, #tpu.memory_space<vmem>>, vector<1x128xf32>
    %2 = vector.broadcast %1 : vector<1x128xf32> to vector<128x128xf32>
    %3 = arith.mulf %0, %2 : vector<128x128xf32>
    %c0_3 = arith.constant 0 : index
    %c0_4 = arith.constant 0 : index
    %4 = vector.load %arg4[%c0_3, %c0_4] : memref<1x128xf32, #tpu.memory_space<vmem>>, vector<1x128xf32>
    %5 = vector.broadcast %4 : vector<1x128xf32> to vector<128x128xf32>
    %6 = arith.addf %3, %5 : vector<128x128xf32>
    %7 = arith.truncf %6 : vector<128x128xf32> to vector<128x128xbf16>
    %c0_5 = arith.constant 0 : index
    %c0_6 = arith.constant 0 : index
    %8 = vector.load %arg2[%c0_5, %c0_6] : memref<128x256xbf16, #tpu.memory_space<vmem>>, vector<128x256xbf16>
    %cst = arith.constant dense<0.000000e+00> : vector<128x256xf32>
    %9 = tpu.matmul %7, %8, %cst {dimension_numbers = #tpu.dot_dimension_numbers<[1], [0], [0], [1], [0, 0, 1, 1], [], []>} : vector<128x128xbf16>, vector<128x256xbf16>, vector<128x256xf32> -> vector<128x256xf32>
    %10 = vector.extract_strided_slice %9 {offsets = [0, 0], sizes = [128, 128], strides = [1, 1]} : vector<128x256xf32> to vector<128x128xf32>
    %11 = arith.truncf %10 : vector<128x128xf32> to vector<128x128xbf16>
    %c0_7 = arith.constant 0 : index
    %c0_8 = arith.constant 0 : index
    %12 = vector.load %arg5[%c0_7, %c0_8] : memref<128x128xbf16, #tpu.memory_space<vmem>>, vector<128x128xbf16>
    tpu.vector_store %arg5[%c0_7, %c0_8], %11 {strides = array<i32>} : memref<128x128xbf16, #tpu.memory_space<vmem>>, vector<128x128xbf16>,
    %13 = vector.extract_strided_slice %9 {offsets = [0, 128], sizes = [128, 128], strides = [1, 1]} : vector<128x256xf32> to vector<128x128xf32>
    %c0_9 = arith.constant 0 : index
    %c0_10 = arith.constant 0 : index
    %14 = vector.load %arg6[%c0_9, %c0_10] : memref<128x128xf32, #tpu.memory_space<vmem>>, vector<128x128xf32>
    tpu.vector_store %arg6[%c0_9, %c0_10], %13 {strides = array<i32>} : memref<128x128xf32, #tpu.memory_space<vmem>>, vector<128x128xf32>,
    return
  }
  func.func @transform_0(%arg0: i32) -> (i32, i32) {
    %c0_i32 = arith.constant 0 : i32
    %c0_i32_0 = arith.constant 0 : i32
    return %arg0, %c0_i32 : i32, i32
  }
  func.func @transform_1(%arg0: i32) -> (i32, i32) {
    %c0_i32 = arith.constant 0 : i32
    %c0_i32_0 = arith.constant 0 : i32
    %c0_i32_1 = arith.constant 0 : i32
    return %c0_i32, %c0_i32_0 : i32, i32
  }
  func.func @transform_2(%arg0: i32) -> (i32, i32) {
    %c0_i32 = arith.constant 0 : i32
    %c0_i32_0 = arith.constant 0 : i32
    %c0_i32_1 = arith.constant 0 : i32
    return %c0_i32, %c0_i32_0 : i32, i32
  }
  func.func @transform_3(%arg0: i32) -> (i32, i32) {
    %c0_i32 = arith.constant 0 : i32
    %c0_i32_0 = arith.constant 0 : i32
    %c0_i32_1 = arith.constant 0 : i32
    return %c0_i32, %c0_i32_0 : i32, i32
  }
  func.func @transform_4(%arg0: i32) -> (i32, i32) {
    %c0_i32 = arith.constant 0 : i32
    %c0_i32_0 = arith.constant 0 : i32
    return %arg0, %c0_i32 : i32, i32
  }
  func.func @transform_5(%arg0: i32) -> (i32, i32) {
    %c0_i32 = arith.constant 0 : i32
    %c0_i32_0 = arith.constant 0 : i32
    return %arg0, %c0_i32 : i32, i32
  }
}

</mosaic_0001>

<llo_original>
// kernel: tpu_custom_call.1
$region0: #{tpu_custom_call.1}
  #allocation0 [shape = 'u32[]', space=smem, size = 0x4, offset = 0x4, fixed_abs, tag = 'smem constant byte address 0x4 - core index']
  #allocation1 [shape = 'u32[72,128]{1,0:T(1,128)}', space=vmem, size = 0x9000, scoped, tag = 'internal scratch']
  %s0 = inlined_call_operand.hbm [shape: f32[256,128], index: 0, kind: input, shape index: {}]
  %s1 = inlined_call_operand.hbm [shape: bf16[128,256], index: 1, kind: input, shape index: {}]
  %s2 = inlined_call_operand.vmem [shape: f32[1,128], index: 2, kind: input, shape index: {}]
  %s3 = inlined_call_operand.vmem [shape: f32[1,128], index: 3, kind: input, shape index: {}]
  %s4 = inlined_call_operand.hbm [shape: bf16[256,128], index: 4, kind: output, shape index: {0}]
  %s5 = inlined_call_operand.hbm [shape: f32[256,128], index: 5, kind: output, shape index: {1}]
  %6 = xla_tuple %s4, %s5
  %s7 = sld [smem:[#allocation0]]
  $region65: #{tpu_custom_call.1} parent=0
    _
  %s9 = ssub.s32 1, %s7
  %s10 = scalar_select 0, %s9, %s7
  $region1: #{tpu_custom_call.1} parent=0
    #allocation2 [shape = 'u8[131072]{0}', space=vmem, size = 0x20000, scoped, tag = 'input window, operand 0']
    #allocation3 [shape = 's32[2]{0}', space=sflag, size = 0x8, scoped, tag = 'scoped memory for tpu_custom_call.1']
    #allocation4 [shape = 's32[2]{0}', space=sflag, size = 0x8, scoped, tag = 'scoped memory for tpu_custom_call.1']
    #allocation5 [shape = 'u8[65536]{0}', space=vmem, size = 0x10000, scoped, tag = 'input window, operand 1, single buffered']
    #allocation6 [shape = 's32[1]{0}', space=sflag, size = 0x4, scoped, tag = 'scoped memory for tpu_custom_call.1']
    #allocation7 [shape = 'u8[65536]{0}', space=vmem, size = 0x10000, scoped, tag = 'output window, operand 0']
    #allocation8 [shape = 'u8[131072]{0}', space=vmem, size = 0x20000, scoped, tag = 'output window, operand 1']
    #allocation9 [shape = 's32[2]{0}', space=sflag, size = 0x8, scoped, tag = 'scoped memory for tpu_custom_call.1']
    %11 = vsyncpa [#allocation3], 0
    %s12 = scalar_lea.sflag [#allocation3], 1
    %13 = vsyncpa %s12, 0
    %14 = vsyncpa [#allocation6], 0
    %15 = vsyncpa [#allocation4], 0
    %s16 = scalar_lea.sflag [#allocation4], 1
    %17 = vsyncpa %s16, 0
    %18 = vsyncpa [#allocation9], 0
    %s19 = scalar_lea.sflag [#allocation9], 1
    %20 = vsyncpa %s19, 0
    loop: start=0, step=1, limit=4
    $region2: #{tpu_custom_call.1} parent=1 // loop_pre_header
      _
    $region3: #{tpu_custom_call.1} parent=1 // loop_header
      %s22 = sphi 0, %s26
      %p23 = scmp.ge.s32.totalorder %s22, 4
      %s32 = sphi 0, %s34
      %s35 = sphi 0, %s32
      %s36 = sphi 0, %s35
      %s52 = sphi 0, %s36
      %s56 = sphi 0, %s56
      %s58 = sphi 0, %s56
      %s59 = sphi 0, %s58
      %s73 = sphi 0, %s59
      %s77 = sphi 0, %s77
      %s79 = sphi 0, %s77
      %s80 = sphi 0, %s79
      %s94 = sphi 0, %s80
      %s98 = sphi 0, %s98
      %s100 = sphi 0, %s98
      %s101 = sphi 0, %s100
      %s115 = sphi 0, %s101
      %s121 = sphi 0, %s123
      %s124 = sphi 0, %s121
      %s125 = sphi 0, %s124
      %s141 = sphi 0, %s125
      %s147 = sphi 0, %s149
      %s150 = sphi 0, %s147
      %s151 = sphi 0, %s150
      %s167 = sphi 0, %s151
    $region4: #{tpu_custom_call.1} parent=1 // loop_header_branch
      %25 = sbr.rel (%p23) target = $region8
    $region5: #{tpu_custom_call.1} parent=1 // loop_body
      %s27 = ssub.s32 %s22, 1
      %s28 = ssub.s32 %s22, 2
      %s29 = sadd.s32 %s22, 1
      %s30 = ssub.s32 %s22, %s29
      %p31 = scmp.eq.s32.totalorder %s30, 0
      %s33 = sadd.s32 %s32, 1
      %s34 = scalar_select %p31, %s32, %s33
      %p37 = pneg %p31
      %p38 = scmp.eq.s32.totalorder %s22, 1
      %p39 = por %p37, %p38
      %p40 = scmp.ne.s32.totalorder %s32, %s35
      %p41 = scmp.eq.s32.totalorder %s22, 0
      %p42 = por %p40, %p41
      %p43 = scmp.ne.s32.totalorder %s32, %s35
      %p44 = scmp.eq.s32.totalorder %s27, 1
      %p45 = por %p43, %p44
      %p46 = scmp.ne.s32.totalorder %s35, %s36
      %p47 = scmp.eq.s32.totalorder %s27, 0
      %p48 = por %p46, %p47
      %p49 = scmp.ne.s32.totalorder %s35, %s36
      %p50 = scmp.eq.s32.totalorder %s28, 1
      %p51 = por %p49, %p50
      %p53 = scmp.ne.s32.totalorder %s36, %s52
      %p54 = scmp.eq.s32.totalorder %s28, 0
      %p55 = por %p53, %p54
      %s57 = sadd.s32 %s56, 1
      %p60 = scmp.eq.s32.totalorder %s22, 1
      %p61 = scmp.ne.s32.totalorder %s56, %s58
      %p62 = scmp.eq.s32.totalorder %s22, 0
      %p63 = por %p61, %p62
      %p64 = scmp.ne.s32.totalorder %s56, %s58
      %p65 = scmp.eq.s32.totalorder %s27, 1
      %p66 = por %p64, %p65
      %p67 = scmp.ne.s32.totalorder %s58, %s59
      %p68 = scmp.eq.s32.totalorder %s27, 0
      %p69 = por %p67, %p68
      %p70 = scmp.ne.s32.totalorder %s58, %s59
      %p71 = scmp.eq.s32.totalorder %s28, 1
      %p72 = por %p70, %p71
      %p74 = scmp.ne.s32.totalorder %s59, %s73
      %p75 = scmp.eq.s32.totalorder %s28, 0
      %p76 = por %p74, %p75
      %s78 = sadd.s32 %s77, 1
      %p81 = scmp.eq.s32.totalorder %s22, 1
      %p82 = scmp.ne.s32.totalorder %s77, %s79
      %p83 = scmp.eq.s32.totalorder %s22, 0
      %p84 = por %p82, %p83
      %p85 = scmp.ne.s32.totalorder %s77, %s79
      %p86 = scmp.eq.s32.totalorder %s27, 1
      %p87 = por %p85, %p86
      %p88 = scmp.ne.s32.totalorder %s79, %s80
      %p89 = scmp.eq.s32.totalorder %s27, 0
      %p90 = por %p88, %p89
      %p91 = scmp.ne.s32.totalorder %s79, %s80
      %p92 = scmp.eq.s32.totalorder %s28, 1
      %p93 = por %p91, %p92
      %p95 = scmp.ne.s32.totalorder %s80, %s94
      %p96 = scmp.eq.s32.totalorder %s28, 0
      %p97 = por %p95, %p96
      %s99 = sadd.s32 %s98, 1
      %p102 = scmp.eq.s32.totalorder %s22, 1
      %p103 = scmp.ne.s32.totalorder %s98, %s100
      %p104 = scmp.eq.s32.totalorder %s22, 0
      %p105 = por %p103, %p104
      %p106 = scmp.ne.s32.totalorder %s98, %s100
      %p107 = scmp.eq.s32.totalorder %s27, 1
      %p108 = por %p106, %p107
      %p109 = scmp.ne.s32.totalorder %s100, %s101
      %p110 = scmp.eq.s32.totalorder %s27, 0
      %p111 = por %p109, %p110
      %p112 = scmp.ne.s32.totalorder %s100, %s101
      %p113 = scmp.eq.s32.totalorder %s28, 1
      %p114 = por %p112, %p113
      %p116 = scmp.ne.s32.totalorder %s101, %s115
      %p117 = scmp.eq.s32.totalorder %s28, 0
      %p118 = por %p116, %p117
      %s119 = ssub.s32 %s22, %s29
      %p120 = scmp.eq.s32.totalorder %s119, 0
      %s122 = sadd.s32 %s121, 1
      %s123 = scalar_select %p120, %s121, %s122
      %p126 = pneg %p120
      %p127 = scmp.eq.s32.totalorder %s22, 1
      %p128 = por %p126, %p127
      %p129 = scmp.ne.s32.totalorder %s121, %s124
      %p130 = scmp.eq.s32.totalorder %s22, 0
      %p131 = por %p129, %p130
      %p132 = scmp.ne.s32.totalorder %s121, %s124
      %p133 = scmp.eq.s32.totalorder %s27, 1
      %p134 = por %p132, %p133
      %p135 = scmp.ne.s32.totalorder %s124, %s125
      %p136 = scmp.eq.s32.totalorder %s27, 0
      %p137 = por %p135, %p136
      %p138 = scmp.ne.s32.totalorder %s124, %s125
      %p139 = scmp.eq.s32.totalorder %s28, 1
      %p140 = por %p138, %p139
      %p142 = scmp.ne.s32.totalorder %s125, %s141
      %p143 = scmp.eq.s32.totalorder %s28, 0
      %p144 = por %p142, %p143
      %s145 = ssub.s32 %s22, %s29
      %p146 = scmp.eq.s32.totalorder %s145, 0
      %s148 = sadd.s32 %s147, 1
      %s149 = scalar_select %p146, %s147, %s148
      %p152 = pneg %p146
      %p153 = scmp.eq.s32.totalorder %s22, 1
      %p154 = por %p152, %p153
      %p155 = scmp.ne.s32.totalorder %s147, %s150
      %p156 = scmp.eq.s32.totalorder %s22, 0
      %p157 = por %p155, %p156
      %p158 = scmp.ne.s32.totalorder %s147, %s150
      %p159 = scmp.eq.s32.totalorder %s27, 1
      %p160 = por %p158, %p159
      %p161 = scmp.ne.s32.totalorder %s150, %s151
      %p162 = scmp.eq.s32.totalorder %s27, 0
      %p163 = por %p161, %p162
      %p164 = scmp.ne.s32.totalorder %s150, %s151
      %p165 = scmp.eq.s32.totalorder %s28, 1
      %p166 = por %p164, %p165
      %p168 = scmp.ne.s32.totalorder %s151, %s167
      %p169 = scmp.eq.s32.totalorder %s28, 0
      %p170 = por %p168, %p169
      %p171 = scmp.le.s32.totalorder 1, %s22
      %p172 = scmp.lt.s32.totalorder %s22, 3
      %p173 = pnand %p171, %p172
      %p174 = pneg %p173
      // Predicated region
      $region9: #{tpu_custom_call.1} parent=5 // pred_check
        _
      $region10: #{tpu_custom_call.1} parent=5 // pred_check_branch
        %176 = sbr.rel (%p173) target = $region12
      $region11: #{tpu_custom_call.1} parent=5 // pred_region
        %s177 = ssub.s32 %s22, 1
        // Predicated region
        $region13: #{tpu_custom_call.1} parent=11 // pred_check
          %p178 = pneg %p69
        $region14: #{tpu_custom_call.1} parent=11 // pred_check_branch
          %180 = sbr.rel (%p178) target = $region16
        $region15: #{tpu_custom_call.1} parent=11 // pred_region
          %182 = vsyncadd [#allocation6], 0
          %s183 = sshll.u32 %s1, 4
          %s184 = int_to_ptr.hbm [resolvable:$true] %s183
          %s185 = sshll.u32 [#allocation5], 4
          %s186 = int_to_ptr.vmem [resolvable:$true] %s185
          %191 = dma.hbm_to_vmem [thread:$0]  %s184, 2048, %s186, [#allocation6], 128, 128, 8
        $region16: #{tpu_custom_call.1} parent=11 // pred_fallthru
          _
        // Predicated region
        $region17: #{tpu_custom_call.1} parent=11 // pred_check
          %p192 = pneg %p90
        $region18: #{tpu_custom_call.1} parent=11 // pred_check_branch
          %194 = sbr.rel (%p192) target = $region20
        $region19: #{tpu_custom_call.1} parent=11 // pred_region
          _
        $region20: #{tpu_custom_call.1} parent=11 // pred_fallthru
          _
        // Predicated region
        $region21: #{tpu_custom_call.1} parent=11 // pred_check
          %p195 = pneg %p111
        $region22: #{tpu_custom_call.1} parent=11 // pred_check_branch
          %197 = sbr.rel (%p195) target = $region24
        $region23: #{tpu_custom_call.1} parent=11 // pred_region
          _
        $region24: #{tpu_custom_call.1} parent=11 // pred_fallthru
          _
      $region12: #{tpu_custom_call.1} parent=5 // pred_fallthru
        _
      %p198 = scmp.lt.s32.totalorder %s22, 2
      // Predicated region
      $region25: #{tpu_custom_call.1} parent=5 // pred_check
        %p199 = pneg %p198
      $region26: #{tpu_custom_call.1} parent=5 // pred_check_branch
        %201 = sbr.rel (%p199) target = $region28
      $region27: #{tpu_custom_call.1} parent=5 // pred_region
        // Predicated region
        $region29: #{tpu_custom_call.1} parent=27 // pred_check
          %p202 = pneg %p42
        $region30: #{tpu_custom_call.1} parent=27 // pred_check_branch
          %204 = sbr.rel (%p202) target = $region32
        $region31: #{tpu_custom_call.1} parent=27 // pred_region
          %s205 = sand.u32 %s32, 1
          %s206 = scalar_lea.sflag [#allocation3], %s205
          %s207 = sand.u32 %s32, 1
          %s208 = smul.addr %s207, 128
          %s209 = scalar_lea.vmem [#allocation2], %s208
          %s210 = smul.u32 16, %s22
          %212 = vsyncadd %s206, 0
          %s213 = smul.addr %s210, 8
          %s214 = scalar_lea.hbm %s0, %s213
          %s215 = sshll.u32 %s214, 4
          %s216 = int_to_ptr.hbm [resolvable:$true] %s215
          %s217 = sshll.u32 %s209, 4
          %s218 = int_to_ptr.vmem [resolvable:$true] %s217
          %223 = dma.hbm_to_vmem [thread:$0]  %s216, 2048, %s218, %s206, 128, 128, 8
        $region32: #{tpu_custom_call.1} parent=27 // pred_fallthru
          _
      $region28: #{tpu_custom_call.1} parent=5 // pred_fallthru
        _
      %p224 = scmp.le.s32.totalorder 1, %s22
      %p225 = scmp.lt.s32.totalorder %s22, 3
      %p226 = pnand %p224, %p225
      %p227 = pneg %p226
      // Predicated region
      $region33: #{tpu_custom_call.1} parent=5 // pred_check
        _
      $region34: #{tpu_custom_call.1} parent=5 // pred_check_branch
        %229 = sbr.rel (%p226) target = $region36
      $region35: #{tpu_custom_call.1} parent=5 // pred_region
        %s230 = ssub.s32 %s22, 1
        %s231 = sand.u32 %s35, 1
        %s232 = scalar_lea.sflag [#allocation3], %s231
        %s233 = sand.u32 %s35, 1
        %s234 = smul.addr %s233, 128
        %s235 = scalar_lea.vmem [#allocation2], %s234
        // Predicated region
        $region37: #{tpu_custom_call.1} parent=35 // pred_check
          %p236 = pneg %p48
        $region38: #{tpu_custom_call.1} parent=35 // pred_check_branch
          %238 = sbr.rel (%p236) target = $region40
        $region39: #{tpu_custom_call.1} parent=35 // pred_region
          %240 = dma.done %s232, 2048
        $region40: #{tpu_custom_call.1} parent=35 // pred_fallthru
          _
        // Predicated region
        $region41: #{tpu_custom_call.1} parent=35 // pred_check
          %p241 = pneg %p69
        $region42: #{tpu_custom_call.1} parent=35 // pred_check_branch
          %243 = sbr.rel (%p241) target = $region44
        $region43: #{tpu_custom_call.1} parent=35 // pred_region
          %245 = dma.done [#allocation6], 2048
        $region44: #{tpu_custom_call.1} parent=35 // pred_fallthru
          _
        %s246 = sand.u32 %s35, 1
        %s247 = scalar_lea.sflag [#allocation3], %s246
        %s248 = sand.u32 %s35, 1
        %s249 = smul.addr %s248, 128
        %s250 = scalar_lea.vmem [#allocation2], %s249
        %p251 = pneg %p48
        %p252 = pneg %p45
        %p253 = pneg %p69
        %p254 = pneg %p66
        %p255 = pneg %p90
        %p256 = pneg %p87
        %p257 = pneg %p111
        %p258 = pneg %p108
        %p259 = pneg %p137
        %p260 = pneg %p134
        %s261 = sand.u32 %s124, 1
        %s262 = scalar_lea.sflag [#allocation4], %s261
        %s263 = sand.u32 %s124, 1
        %s264 = smul.addr %s263, 64
        %s265 = scalar_lea.vmem [#allocation7], %s264
        %p266 = pneg %p163
        %p267 = pneg %p160
        %s268 = sand.u32 %s150, 1
        %s269 = scalar_lea.sflag [#allocation9], %s268
        %s270 = sand.u32 %s150, 1
        %s271 = smul.addr %s270, 128
        %s272 = scalar_lea.vmem [#allocation8], %s271
        %s273 = smul.u32 16, %s27
        %s274 = smul.u32 16, %s27
        %s275 = smul.u32 16, %s27
        %v276 = vld [vmem:[%s235] sm:$0xff]
        %v277 = vld [vmem:[%s235 + $0x8] sm:$0xff]
        %v278 = vld [vmem:[%s235 + $0x10] sm:$0xff]
        %v279 = vld [vmem:[%s235 + $0x18] sm:$0xff]
        %v280 = vld [vmem:[%s235 + $0x20] sm:$0xff]
        %v281 = vld [vmem:[%s235 + $0x28] sm:$0xff]
        %v282 = vld [vmem:[%s235 + $0x30] sm:$0xff]
        %v283 = vld [vmem:[%s235 + $0x38] sm:$0xff]
        %v284 = vld [vmem:[%s235 + $0x40] sm:$0xff]
        %v285 = vld [vmem:[%s235 + $0x48] sm:$0xff]
        %v286 = vld [vmem:[%s235 + $0x50] sm:$0xff]
        %v287 = vld [vmem:[%s235 + $0x58] sm:$0xff]
        %v288 = vld [vmem:[%s235 + $0x60] sm:$0xff]
        %v289 = vld [vmem:[%s235 + $0x68] sm:$0xff]
        %v290 = vld [vmem:[%s235 + $0x70] sm:$0xff]
        %v291 = vld [vmem:[%s235 + $0x78] sm:$0xff]
        %v292 = vld [vmem:[%s2] sm:$0x1]
        %v294 = vperm.slane %v292, 0
        %v296 = vmul.f32 %v276, %v294
        %v297 = vmul.f32 %v277, %v294
        %v298 = vmul.f32 %v278, %v294
        %v299 = vmul.f32 %v279, %v294
        %v300 = vmul.f32 %v280, %v294
        %v301 = vmul.f32 %v281, %v294
        %v302 = vmul.f32 %v282, %v294
        %v303 = vmul.f32 %v283, %v294
        %v304 = vmul.f32 %v284, %v294
        %v305 = vmul.f32 %v285, %v294
        %v306 = vmul.f32 %v286, %v294
        %v307 = vmul.f32 %v287, %v294
        %v308 = vmul.f32 %v288, %v294
        %v309 = vmul.f32 %v289, %v294
        %v310 = vmul.f32 %v290, %v294
        %v311 = vmul.f32 %v291, %v294
        %v312 = vld [vmem:[%s3] sm:$0x1]
        %v314 = vperm.slane %v312, 0
        %v316 = vadd.f32 %v296, %v314
        %v317 = vadd.f32 %v297, %v314
        %v318 = vadd.f32 %v298, %v314
        %v319 = vadd.f32 %v299, %v314
        %v320 = vadd.f32 %v300, %v314
        %v321 = vadd.f32 %v301, %v314
        %v322 = vadd.f32 %v302, %v314
        %v323 = vadd.f32 %v303, %v314
        %v324 = vadd.f32 %v304, %v314
        %v325 = vadd.f32 %v305, %v314
        %v326 = vadd.f32 %v306, %v314
        %v327 = vadd.f32 %v307, %v314
        %v328 = vadd.f32 %v308, %v314
        %v329 = vadd.f32 %v309, %v314
        %v330 = vadd.f32 %v310, %v314
        %v331 = vadd.f32 %v311, %v314
        %v332 = vpack.c.bf16 %v317, %v316
        %v333 = vpack.c.bf16 %v319, %v318
        %v334 = vpack.c.bf16 %v321, %v320
        %v335 = vpack.c.bf16 %v323, %v322
        %v336 = vpack.c.bf16 %v325, %v324
        %v337 = vpack.c.bf16 %v327, %v326
        %v338 = vpack.c.bf16 %v329, %v328
        %v339 = vpack.c.bf16 %v331, %v330
        %v340 = vld [vmem:[#allocation5] sm:$0xff]
        %v341 = vld [vmem:[#allocation5 + $0x8] sm:$0xff]
        %v342 = vld [vmem:[#allocation5 + $0x10] sm:$0xff]
        %v343 = vld [vmem:[#allocation5 + $0x18] sm:$0xff]
        %v344 = vld [vmem:[#allocation5 + $0x20] sm:$0xff]
        %v345 = vld [vmem:[#allocation5 + $0x28] sm:$0xff]
        %v346 = vld [vmem:[#allocation5 + $0x30] sm:$0xff]
        %v347 = vld [vmem:[#allocation5 + $0x38] sm:$0xff]
        %v348 = vld [vmem:[#allocation5 + $0x40] sm:$0xff]
        %v349 = vld [vmem:[#allocation5 + $0x48] sm:$0xff]
        %v350 = vld [vmem:[#allocation5 + $0x50] sm:$0xff]
        %v351 = vld [vmem:[#allocation5 + $0x58] sm:$0xff]
        %v352 = vld [vmem:[#allocation5 + $0x60] sm:$0xff]
        %v353 = vld [vmem:[#allocation5 + $0x68] sm:$0xff]
        %v354 = vld [vmem:[#allocation5 + $0x70] sm:$0xff]
        %v355 = vld [vmem:[#allocation5 + $0x78] sm:$0xff]
        %v372 = vunpack.c.l.b16 %v340
        %v373 = vunpack.c.h.b16 %v340
        %v374 = vunpack.c.l.b16 %v341
        %v375 = vunpack.c.h.b16 %v341
        %v376 = vunpack.c.l.b16 %v342
        %v377 = vunpack.c.h.b16 %v342
        %v378 = vunpack.c.l.b16 %v343
        %v379 = vunpack.c.h.b16 %v343
        %v380 = vunpack.c.l.b16 %v344
        %v381 = vunpack.c.h.b16 %v344
        %v382 = vunpack.c.l.b16 %v345
        %v383 = vunpack.c.h.b16 %v345
        %v384 = vunpack.c.l.b16 %v346
        %v385 = vunpack.c.h.b16 %v346
        %v386 = vunpack.c.l.b16 %v347
        %v387 = vunpack.c.h.b16 %v347
        %v388 = vunpack.c.l.b16 %v348
        %v389 = vunpack.c.h.b16 %v348
        %v390 = vunpack.c.l.b16 %v349
        %v391 = vunpack.c.h.b16 %v349
        %v392 = vunpack.c.l.b16 %v350
        %v393 = vunpack.c.h.b16 %v350
        %v394 = vunpack.c.l.b16 %v351
        %v395 = vunpack.c.h.b16 %v351
        %v396 = vunpack.c.l.b16 %v352
        %v397 = vunpack.c.h.b16 %v352
        %v398 = vunpack.c.l.b16 %v353
        %v399 = vunpack.c.h.b16 %v353
        %v400 = vunpack.c.l.b16 %v354
        %v401 = vunpack.c.h.b16 %v354
        %v402 = vunpack.c.l.b16 %v355
        %v403 = vunpack.c.h.b16 %v355
        %v404 = vpack.c.b16 %v374, %v372
        %v405 = vpack.c.b16 %v375, %v373
        %v406 = vpack.c.b16 %v378, %v376
        %v407 = vpack.c.b16 %v379, %v377
        %v408 = vpack.c.b16 %v382, %v380
        %v409 = vpack.c.b16 %v383, %v381
        %v410 = vpack.c.b16 %v386, %v384
        %v411 = vpack.c.b16 %v387, %v385
        %v412 = vpack.c.b16 %v390, %v388
        %v413 = vpack.c.b16 %v391, %v389
        %v414 = vpack.c.b16 %v394, %v392
        %v415 = vpack.c.b16 %v395, %v393
        %v416 = vpack.c.b16 %v398, %v396
        %v417 = vpack.c.b16 %v399, %v397
        %v418 = vpack.c.b16 %v402, %v400
        %v419 = vpack.c.b16 %v403, %v401
        %436 = vmatpush.bf16.msra.mxu0 %v418
        %437 = vmatpush.bf16.msra.mxu0 %v416
        %438 = vmatpush.bf16.msra.mxu0 %v414
        %439 = vmatpush.bf16.msra.mxu0 %v412
        %440 = vmatpush.bf16.msra.mxu0 %v410
        %441 = vmatpush.bf16.msra.mxu0 %v408
        %442 = vmatpush.bf16.msra.mxu0 %v406
        %443 = vmatpush.bf16.msra.mxu0 %v404
        %444 = vmatmul.bf16.gmra.mxu0 %v332
        %v445 = vpop.f32.mrf.mxu0
        %v446 = vadd.f32 0.0, %v445
        %v447 = vpop.f32.mrf.mxu0
        %v448 = vadd.f32 0.0, %v447
        %449 = vmatmul.bf16.gmra.mxu0 %v333
        %v450 = vpop.f32.mrf.mxu0
        %v451 = vadd.f32 0.0, %v450
        %v452 = vpop.f32.mrf.mxu0
        %v453 = vadd.f32 0.0, %v452
        %454 = vmatmul.bf16.gmra.mxu0 %v334
        %v455 = vpop.f32.mrf.mxu0
        %v456 = vadd.f32 0.0, %v455
        %v457 = vpop.f32.mrf.mxu0
        %v458 = vadd.f32 0.0, %v457
        %459 = vmatmul.bf16.gmra.mxu0 %v335
        %v460 = vpop.f32.mrf.mxu0
        %v461 = vadd.f32 0.0, %v460
        %v462 = vpop.f32.mrf.mxu0
        %v463 = vadd.f32 0.0, %v462
        %464 = vmatmul.bf16.gmra.mxu0 %v336
        %v465 = vpop.f32.mrf.mxu0
        %v466 = vadd.f32 0.0, %v465
        %v467 = vpop.f32.mrf.mxu0
        %v468 = vadd.f32 0.0, %v467
        %469 = vmatmul.bf16.gmra.mxu0 %v337
        %v470 = vpop.f32.mrf.mxu0
        %v471 = vadd.f32 0.0, %v470
        %v472 = vpop.f32.mrf.mxu0
        %v473 = vadd.f32 0.0, %v472
        %474 = vmatmul.bf16.gmra.mxu0 %v338
        %v475 = vpop.f32.mrf.mxu0
        %v476 = vadd.f32 0.0, %v475
        %v477 = vpop.f32.mrf.mxu0
        %v478 = vadd.f32 0.0, %v477
        %479 = vmatmul.bf16.gmra.mxu0 %v339
        %v480 = vpop.f32.mrf.mxu0
        %v481 = vadd.f32 0.0, %v480
        %v482 = vpop.f32.mrf.mxu0
        %v483 = vadd.f32 0.0, %v482
        %484 = vdwg.mxu0
        %485 = vmatpush.bf16.msra.mxu0 %v419
        %486 = vmatpush.bf16.msra.mxu0 %v417
        %487 = vmatpush.bf16.msra.mxu0 %v415
        %488 = vmatpush.bf16.msra.mxu0 %v413
        %489 = vmatpush.bf16.msra.mxu0 %v411
        %490 = vmatpush.bf16.msra.mxu0 %v409
        %491 = vmatpush.bf16.msra.mxu0 %v407
        %492 = vmatpush.bf16.msra.mxu0 %v405
        %493 = vmatmul.bf16.gmra.mxu0 %v332
        %v494 = vpop.f32.mrf.mxu0
        %v495 = vadd.f32 0.0, %v494
        %v496 = vpop.f32.mrf.mxu0
        %v497 = vadd.f32 0.0, %v496
        %498 = vmatmul.bf16.gmra.mxu0 %v333
        %v499 = vpop.f32.mrf.mxu0
        %v500 = vadd.f32 0.0, %v499
        %v501 = vpop.f32.mrf.mxu0
        %v502 = vadd.f32 0.0, %v501
        %503 = vmatmul.bf16.gmra.mxu0 %v334
        %v504 = vpop.f32.mrf.mxu0
        %v505 = vadd.f32 0.0, %v504
        %v506 = vpop.f32.mrf.mxu0
        %v507 = vadd.f32 0.0, %v506
        %508 = vmatmul.bf16.gmra.mxu0 %v335
        %v509 = vpop.f32.mrf.mxu0
        %v510 = vadd.f32 0.0, %v509
        %v511 = vpop.f32.mrf.mxu0
        %v512 = vadd.f32 0.0, %v511
        %513 = vmatmul.bf16.gmra.mxu0 %v336
        %v514 = vpop.f32.mrf.mxu0
        %v515 = vadd.f32 0.0, %v514
        %v516 = vpop.f32.mrf.mxu0
        %v517 = vadd.f32 0.0, %v516
        %518 = vmatmul.bf16.gmra.mxu0 %v337
        %v519 = vpop.f32.mrf.mxu0
        %v520 = vadd.f32 0.0, %v519
        %v521 = vpop.f32.mrf.mxu0
        %v522 = vadd.f32 0.0, %v521
        %523 = vmatmul.bf16.gmra.mxu0 %v338
        %v524 = vpop.f32.mrf.mxu0
        %v525 = vadd.f32 0.0, %v524
        %v526 = vpop.f32.mrf.mxu0
        %v527 = vadd.f32 0.0, %v526
        %528 = vmatmul.bf16.gmra.mxu0 %v339
        %v529 = vpop.f32.mrf.mxu0
        %v530 = vadd.f32 0.0, %v529
        %v531 = vpop.f32.mrf.mxu0
        %v532 = vadd.f32 0.0, %v531
        %533 = vdwg.mxu0
        %v534 = vpack.c.bf16 %v446, %v446
        %v535 = vpack.c.bf16 %v448, %v448
        %v536 = vpack.c.bf16 %v451, %v451
        %v537 = vpack.c.bf16 %v453, %v453
        %v538 = vpack.c.bf16 %v456, %v456
        %v539 = vpack.c.bf16 %v458, %v458
        %v540 = vpack.c.bf16 %v461, %v461
        %v541 = vpack.c.bf16 %v463, %v463
        %v542 = vpack.c.bf16 %v466, %v466
        %v543 = vpack.c.bf16 %v468, %v468
        %v544 = vpack.c.bf16 %v471, %v471
        %v545 = vpack.c.bf16 %v473, %v473
        %v546 = vpack.c.bf16 %v476, %v476
        %v547 = vpack.c.bf16 %v478, %v478
        %v548 = vpack.c.bf16 %v481, %v481
        %v549 = vpack.c.bf16 %v483, %v483
        %550 = vst [vmem:[%s265] sm:$0xf] %v534
        %551 = vst [vmem:[%s265 + $0x4] sm:$0xf] %v535
        %552 = vst [vmem:[%s265 + $0x8] sm:$0xf] %v536
        %553 = vst [vmem:[%s265 + $0xc] sm:$0xf] %v537
        %554 = vst [vmem:[%s265 + $0x10] sm:$0xf] %v538
        %555 = vst [vmem:[%s265 + $0x14] sm:$0xf] %v539
        %556 = vst [vmem:[%s265 + $0x18] sm:$0xf] %v540
        %557 = vst [vmem:[%s265 + $0x1c] sm:$0xf] %v541
        %558 = vst [vmem:[%s265 + $0x20] sm:$0xf] %v542
        %559 = vst [vmem:[%s265 + $0x24] sm:$0xf] %v543
        %560 = vst [vmem:[%s265 + $0x28] sm:$0xf] %v544
        %561 = vst [vmem:[%s265 + $0x2c] sm:$0xf] %v545
        %562 = vst [vmem:[%s265 + $0x30] sm:$0xf] %v546
        %563 = vst [vmem:[%s265 + $0x34] sm:$0xf] %v547
        %564 = vst [vmem:[%s265 + $0x38] sm:$0xf] %v548
        %565 = vst [vmem:[%s265 + $0x3c] sm:$0xf] %v549
        %566 = vst [vmem:[%s272] sm:$0xff] %v495
        %567 = vst [vmem:[%s272 + $0x8] sm:$0xff] %v497
        %568 = vst [vmem:[%s272 + $0x10] sm:$0xff] %v500
        %569 = vst [vmem:[%s272 + $0x18] sm:$0xff] %v502
        %570 = vst [vmem:[%s272 + $0x20] sm:$0xff] %v505
        %571 = vst [vmem:[%s272 + $0x28] sm:$0xff] %v507
        %572 = vst [vmem:[%s272 + $0x30] sm:$0xff] %v510
        %573 = vst [vmem:[%s272 + $0x38] sm:$0xff] %v512
        %574 = vst [vmem:[%s272 + $0x40] sm:$0xff] %v515
        %575 = vst [vmem:[%s272 + $0x48] sm:$0xff] %v517
        %576 = vst [vmem:[%s272 + $0x50] sm:$0xff] %v520
        %577 = vst [vmem:[%s272 + $0x58] sm:$0xff] %v522
        %578 = vst [vmem:[%s272 + $0x60] sm:$0xff] %v525
        %579 = vst [vmem:[%s272 + $0x68] sm:$0xff] %v527
        %580 = vst [vmem:[%s272 + $0x70] sm:$0xff] %v530
        %581 = vst [vmem:[%s272 + $0x78] sm:$0xff] %v532
        %s582 = sand.u32 %s124, 1
        %s583 = scalar_lea.sflag [#allocation4], %s582
        %s584 = sand.u32 %s124, 1
        %s585 = smul.addr %s584, 64
        %s586 = scalar_lea.vmem [#allocation7], %s585
        %s587 = sand.u32 %s150, 1
        %s588 = scalar_lea.sflag [#allocation9], %s587
        %s589 = sand.u32 %s150, 1
        %s590 = smul.addr %s589, 128
        %s591 = scalar_lea.vmem [#allocation8], %s590
        // Predicated region
        $region45: #{tpu_custom_call.1} parent=35 // pred_check
          %p592 = pneg %p134
        $region46: #{tpu_custom_call.1} parent=35 // pred_check_branch
          %594 = sbr.rel (%p592) target = $region48
        $region47: #{tpu_custom_call.1} parent=35 // pred_region
          %s595 = smul.u32 16, %s27
          %597 = vsyncadd %s583, 0
          %s598 = smul.addr %s595, 4
          %s599 = scalar_lea.hbm %s4, %s598
          %s600 = sshll.u32 %s586, 4
          %s601 = int_to_ptr.vmem [resolvable:$true] %s600
          %s602 = sshll.u32 %s599, 4
          %s603 = int_to_ptr.hbm [resolvable:$true] %s602
          %608 = dma.vmem_to_hbm [thread:$0]  %s601, 1024, %s603, %s583, 64, 64, 4
        $region48: #{tpu_custom_call.1} parent=35 // pred_fallthru
          _
        // Predicated region
        $region49: #{tpu_custom_call.1} parent=35 // pred_check
          %p609 = pneg %p160
        $region50: #{tpu_custom_call.1} parent=35 // pred_check_branch
          %611 = sbr.rel (%p609) target = $region52
        $region51: #{tpu_custom_call.1} parent=35 // pred_region
          %s612 = smul.u32 16, %s27
          %614 = vsyncadd %s588, 0
          %s615 = smul.addr %s612, 8
          %s616 = scalar_lea.hbm %s5, %s615
          %s617 = sshll.u32 %s591, 4
          %s618 = int_to_ptr.vmem [resolvable:$true] %s617
          %s619 = sshll.u32 %s616, 4
          %s620 = int_to_ptr.hbm [resolvable:$true] %s619
          %625 = dma.vmem_to_hbm [thread:$0]  %s618, 2048, %s620, %s588, 128, 128, 8
        $region52: #{tpu_custom_call.1} parent=35 // pred_fallthru
          _
      $region36: #{tpu_custom_call.1} parent=5 // pred_fallthru
        _
      %p626 = scmp.le.s32.totalorder 2, %s22
      // Predicated region
      $region53: #{tpu_custom_call.1} parent=5 // pred_check
        %p627 = pneg %p626
      $region54: #{tpu_custom_call.1} parent=5 // pred_check_branch
        %629 = sbr.rel (%p627) target = $region56
      $region55: #{tpu_custom_call.1} parent=5 // pred_region
        %s630 = ssub.s32 %s22, 2
        // Predicated region
        $region57: #{tpu_custom_call.1} parent=55 // pred_check
          %p631 = pneg %p140
        $region58: #{tpu_custom_call.1} parent=55 // pred_check_branch
          %633 = sbr.rel (%p631) target = $region60
        $region59: #{tpu_custom_call.1} parent=55 // pred_region
          %s634 = sand.u32 %s125, 1
          %s635 = scalar_lea.sflag [#allocation4], %s634
          %s636 = sand.u32 %s125, 1
          %s637 = smul.addr %s636, 64
          %s638 = scalar_lea.vmem [#allocation7], %s637
          %640 = dma.done %s635, 1024
        $region60: #{tpu_custom_call.1} parent=55 // pred_fallthru
          _
        // Predicated region
        $region61: #{tpu_custom_call.1} parent=55 // pred_check
          %p641 = pneg %p166
        $region62: #{tpu_custom_call.1} parent=55 // pred_check_branch
          %643 = sbr.rel (%p641) target = $region64
        $region63: #{tpu_custom_call.1} parent=55 // pred_region
          %s644 = sand.u32 %s151, 1
          %s645 = scalar_lea.sflag [#allocation9], %s644
          %s646 = sand.u32 %s151, 1
          %s647 = smul.addr %s646, 128
          %s648 = scalar_lea.vmem [#allocation8], %s647
          %650 = dma.done %s645, 2048
        $region64: #{tpu_custom_call.1} parent=55 // pred_fallthru
          _
      $region56: #{tpu_custom_call.1} parent=5 // pred_fallthru
        _
    $region6: #{tpu_custom_call.1} parent=1 // loop_footer
      %s26 = sadd.s32 1, %s22
    $region7: #{tpu_custom_call.1} parent=1 // loop_footer_branch
      %21 = sbr.rel target = $region3
    $region8: #{tpu_custom_call.1} parent=1 // loop_exit
      _
    %651 = vsyncpa [#allocation3], 1
    %s652 = scalar_lea.sflag [#allocation3], 1
    %653 = vsyncpa %s652, 1
    %654 = vsyncpa [#allocation6], 1
    %655 = vsyncpa [#allocation4], 1
    %s656 = scalar_lea.sflag [#allocation4], 1
    %657 = vsyncpa %s656, 1
    %658 = vsyncpa [#allocation9], 1
    %s659 = scalar_lea.sflag [#allocation9], 1
    %660 = vsyncpa %s659, 1

</llo_original>
